<compile_context>
chip_gen: v5e
topology: v5e:2x2
jax: 0.10.0
libtpu: 0.0.40
codegen_flags: <defaults>
</compile_context>

<pallas_src>
from functools import partial

import jax
import jax.numpy as jnp
from jax.experimental import pallas as pl
from jax.experimental.pallas import tpu as pltpu


def convlstm_kernel(inp_ref, c_ref, w_ref, h_out_ref, c_out_ref,
                    *, Ch, Cc, K, W, HW, Kpad):
    # inp_ref: (Cc, Hp*W + 2p)  bf16  row-padded, flat-halo'd x|h slab
    # c_ref:   (Ch, HW)         f32   current cell state
    # w_ref:   (4*Ch, Kpad)     bf16  [W_mat | bias | zeros], gate order i,f,o,g
    # h_out:   (Ch, HW)         bf16
    # c_out:   (Ch, HW)         f32
    p = K // 2
    inp = inp_ref[...]                                            # (Cc, Lin) bf16

    # Column index of every lane (x = n mod W); computed once, reused per tap.
    x_idx = jax.lax.broadcasted_iota(jnp.int32, (1, HW), 1) % W

    # In-kernel im2col: K*K static lane-shifted slices + boundary column masks.
    taps = []
    for dy in range(K):
        for dx in range(K):
            off = dy * W + dx                                     # static offset
            t = inp[:, off:off + HW]                              # (Cc, HW)
            if dx < p:        # left image border: zero columns x < p - dx
                t = jnp.where(x_idx >= (p - dx), t, jnp.zeros_like(t))
            elif dx > p:      # right image border: zero columns x >= W-(dx-p)
                t = jnp.where(x_idx < (W - (dx - p)), t, jnp.zeros_like(t))
            taps.append(t)

    # Patch matrix padded to Kpad rows; row K*K*Cc is all-ones (bias fold).
    rows = taps + [jnp.ones((1, HW), dtype=inp.dtype)]
    n_zero = Kpad - K * K * Cc - 1
    if n_zero > 0:
        rows.append(jnp.zeros((n_zero, HW), dtype=inp.dtype))
    patches = jnp.concatenate(rows, axis=0)                       # (Kpad, HW) bf16

    # One 128-deep MXU pass, f32 accumulation; bias comes along for free.
    acc = jnp.dot(w_ref[...], patches,
                  preferred_element_type=jnp.float32)             # (4*Ch, HW)

    # Fused gate nonlinearities: one sigmoid over contiguous i|f|o rows.
    ifo = jax.nn.sigmoid(acc[: 3 * Ch, :])
    i = ifo[0 * Ch:1 * Ch, :]
    f = ifo[1 * Ch:2 * Ch, :]
    o = ifo[2 * Ch:3 * Ch, :]
    g = jnp.tanh(acc[3 * Ch:, :])

    c_cur = c_ref[...]                                            # f32
    c_next = f * c_cur + i * g
    h_next = o * jnp.tanh(c_next)

    h_out_ref[...] = h_next.astype(h_out_ref.dtype)               # bf16, lane-dense
    c_out_ref[...] = c_next                                       # f32, lane-dense


def prepare_convlstm_params(w_oihw, bias):
    """Once-per-model weight prep (hoisted out of the per-timestep call).

    w_oihw: (4*Ch, Cin+Ch, K, K) PyTorch OIHW conv weight, bias: (4*Ch,).
    Returns (4*Ch, Kpad) bf16: [im2col weight | bias column | zero pad],
    column order (dy, dx) outer / channel inner, matching the kernel's taps.
    """
    Co, Cc, K, _ = w_oihw.shape
    KKCc = K * K * Cc
    Kpad = max(128, ((KKCc + 1 + 127) // 128) * 128)   # pad contraction to 128
    w_mat = jnp.transpose(w_oihw, (0, 2, 3, 1)).reshape(Co, KKCc)
    w_pad = jnp.zeros((Co, Kpad), jnp.float32)
    w_pad = w_pad.at[:, :KKCc].set(w_mat)
    w_pad = w_pad.at[:, KKCc].set(bias)                # folded bias column
    return w_pad.astype(jnp.bfloat16)


def conv_lstm_cell(x_nchw, h_nchw, c_nchw, w_pad, kernel_size):
    """Pallas ConvLSTMCell.forward.

    x:(B,Cin,H,W)  h/c:(B,Ch,H,W)  w_pad: output of prepare_convlstm_params.
    Returns (h_next bf16, c_next f32) in NCHW.
    """
    B, Cin, H, W = x_nchw.shape
    Ch = h_nchw.shape[1]
    K = kernel_size
    p = K // 2
    Cc = Cin + Ch
    HW = H * W
    Hp = H + 2 * p
    Kpad = w_pad.shape[1]
    Lin = Hp * W + 2 * p

    # --- cheap wrapper glue (~1x input bytes, no 9x patch slab) -------------
    comb = jnp.concatenate([x_nchw, h_nchw], axis=1).astype(jnp.bfloat16)
    comb = jnp.pad(comb, ((0, 0), (0, 0), (p, p), (0, 0)))        # row zero-pad
    comb = comb.reshape(B, Cc, Hp * W)
    comb = jnp.pad(comb, ((0, 0), (0, 0), (p, p)))                # flat halo of p
    c_flat = c_nchw.astype(jnp.float32).reshape(B, Ch, HW)        # force f32 state

    kern = partial(convlstm_kernel, Ch=Ch, Cc=Cc, K=K, W=W, HW=HW, Kpad=Kpad)
    h_flat, c_next_flat = pl.pallas_call(
        kern,
        out_shape=(jax.ShapeDtypeStruct((B, Ch, HW), jnp.bfloat16),
                   jax.ShapeDtypeStruct((B, Ch, HW), jnp.float32)),
        grid=(B,),
        in_specs=[
            pl.BlockSpec((None, Cc, Lin), lambda b: (b, 0, 0)),   # x|h slab
            pl.BlockSpec((None, Ch, HW), lambda b: (b, 0, 0)),    # c_cur
            pl.BlockSpec((4 * Ch, Kpad), lambda b: (0, 0)),       # weight (grid-invariant)
        ],
        out_specs=(
            pl.BlockSpec((None, Ch, HW), lambda b: (b, 0, 0)),    # h_next (bf16)
            pl.BlockSpec((None, Ch, HW), lambda b: (b, 0, 0)),    # c_next (f32)
        ),
        compiler_params=pltpu.CompilerParams(
            # batch axis "parallel": v7x's two TensorCores each take a frame.
            dimension_semantics=("parallel",),
            # explicit VMEM budget (v7x has 64 MiB physical, 32 MiB scoped).
            vmem_limit_bytes=32 * 1024 * 1024),
    )(comb, c_flat, w_pad)

    # (B, Ch, H*W) -> (B, Ch, H, W): free reshape, already NCHW.
    return (h_flat.reshape(B, Ch, H, W), c_next_flat.reshape(B, Ch, H, W))


def _reference(x, h, c, w_oihw, bias, *, conv_dtype=jnp.float32):
    """Pure-JAX reference matching the PyTorch module semantics (NCHW/OIHW).

    conv_dtype=bfloat16 reproduces the kernel's deliberate bf16 MXU operands
    (incl. the bf16 folded bias) with f32 accumulation, for a tight check.
    """
    conv = jax.lax.conv_general_dilated(
        jnp.concatenate([x, h], axis=1).astype(conv_dtype),
        w_oihw.astype(conv_dtype),
        window_strides=(1, 1), padding="SAME",
        dimension_numbers=("NCHW", "OIHW", "NCHW"),
        preferred_element_type=jnp.float32)
    conv = conv + bias.astype(conv_dtype).astype(jnp.float32).reshape(1, -1, 1, 1)
    cc_i, cc_f, cc_o, cc_g = jnp.split(conv, 4, axis=1)
    i, f, o = jax.nn.sigmoid(cc_i), jax.nn.sigmoid(cc_f), jax.nn.sigmoid(cc_o)
    g = jnp.tanh(cc_g)
    c_next = f * c + i * g
    h_next = o * jnp.tanh(c_next)
    return h_next, c_next


if __name__ == "__main__":
    B, Cin, H, W = 2, 4, 16, 16
    hidden = 8          # keep Ch a multiple of 8 so gate slices stay tile-aligned
    K = 3

    key = jax.random.PRNGKey(0)
    kx, kh, kc, kw, kb = jax.random.split(key, 5)

    x = jax.random.normal(kx, (B, Cin, H, W), jnp.float32)
    h_cur = jax.random.normal(kh, (B, hidden, H, W), jnp.float32)
    c_cur = jax.random.normal(kc, (B, hidden, H, W), jnp.float32)

    # Conv2d(in=Cin+hidden, out=4*hidden, k=3) params in PyTorch OIHW layout.
    w = 0.1 * jax.random.normal(kw, (4 * hidden, Cin + hidden, K, K), jnp.float32)
    b = 0.1 * jax.random.normal(kb, (4 * hidden,), jnp.float32)

    # Weight prep hoisted: done once, reused for every timestep call.
    w_pad = prepare_convlstm_params(w, b)

    h_next, c_next = conv_lstm_cell(x, h_cur, c_cur, w_pad, K)
    jax.block_until_ready((h_next, c_next))

    # 1) Exact f32 module semantics; loose tolerance covers the deliberate
    #    bf16 MXU operands and the bf16 h_next output (values are O(1)).
    h_ref, c_ref = _reference(x, h_cur, c_cur, w, b)
    assert jnp.allclose(h_next.astype(jnp.float32), h_ref, atol=5e-2, rtol=5e-2)
    assert jnp.allclose(c_next, c_ref, atol=5e-2, rtol=5e-2)

    # 2) Same-precision reference (bf16 conv operands + bf16 bias, f32 accum):
    #    isolates quantization.  c_next is pure f32 math -> tight; h_next is
    #    additionally bf16-stored -> tolerance covers one bf16 ulp.
    h_ref16, c_ref16 = _reference(x, h_cur, c_cur, w, b, conv_dtype=jnp.bfloat16)
    assert jnp.allclose(h_next.astype(jnp.float32), h_ref16, atol=1e-2, rtol=1e-2)
    assert jnp.allclose(c_next, c_ref16, atol=2e-3, rtol=2e-3)

    print("KERNEL_OK")
</pallas_src>

<mosaic_0001>
module attributes {stable_mosaic.version = 11 : i64} {
  func.func @convlstm_kernel(%arg0: i32, %arg1: memref<1x12x290xbf16, #tpu.memory_space<vmem>>, %arg2: memref<1x8x256xf32, #tpu.memory_space<vmem>>, %arg3: memref<32x128xbf16, #tpu.memory_space<vmem>>, %arg4: memref<1x8x256xbf16, #tpu.memory_space<vmem>>, %arg5: memref<1x8x256xf32, #tpu.memory_space<vmem>>) attributes {dimension_semantics = [#tpu.dimension_semantics<parallel>], iteration_bounds = array<i64: 2>, scalar_prefetch = 0 : i64, scratch_operands = 0 : i64, tpu.core_type = #tpu.core_type<tc>, window_params = [{transform_indices = @transform_0, window_bounds = array<i64: 1, 12, 290>}, {transform_indices = @transform_1, window_bounds = array<i64: 1, 8, 256>}, {pipeline_mode = #tpu.pipeline_mode<synchronous>, transform_indices = @transform_2, window_bounds = array<i64: 32, 128>}, {transform_indices = @transform_3, window_bounds = array<i64: 1, 8, 256>}, {transform_indices = @transform_4, window_bounds = array<i64: 1, 8, 256>}]} {
    %c0 = arith.constant 0 : index
    %c0_0 = arith.constant 0 : index
    %c0_1 = arith.constant 0 : index
    %0 = vector.load %arg1[%c0, %c0_0, %c0_1] : memref<1x12x290xbf16, #tpu.memory_space<vmem>>, vector<1x12x290xbf16>
    %1 = vector.shape_cast %0 : vector<1x12x290xbf16> to vector<12x290xbf16>
    %2 = tpu.iota {dimensions = array<i32: 1>} : vector<1x256xi32>
    %c16_i32 = arith.constant 16 : i32
    %c0_i32 = arith.constant 0 : i32
    %3 = arith.cmpi eq, %c16_i32, %c0_i32 : i32
    %c1_i32 = arith.constant 1 : i32
    %4 = arith.select %3, %c1_i32, %c16_i32 : i32
    %5 = vector.broadcast %4 : i32 to vector<1x256xi32>
    %6 = arith.remsi %2, %5 : vector<1x256xi32>
    %c0_i32_2 = arith.constant 0 : i32
    %7 = vector.broadcast %c0_i32_2 : i32 to vector<1x256xi32>
    %8 = arith.cmpi ne, %6, %7 : vector<1x256xi32>
    %c0_i32_3 = arith.constant 0 : i32
    %9 = vector.broadcast %c0_i32_3 : i32 to vector<1x256xi32>
    %10 = arith.cmpi slt, %6, %9 : vector<1x256xi32>
    %c0_i32_4 = arith.constant 0 : i32
    %11 = arith.cmpi slt, %4, %c0_i32_4 : i32
    %12 = vector.broadcast %11 : i1 to vector<1x256xi1>
    %13 = vector.broadcast %12 : vector<1x256xi1> to vector<1x256xi1>
    %14 = arith.xori %10, %13 : vector<1x256xi1>
    %15 = arith.andi %14, %8 : vector<1x256xi1>
    %16 = vector.broadcast %4 : i32 to vector<1x256xi32>
    %17 = arith.addi %6, %16 : vector<1x256xi32>
    %18 = arith.select %15, %17, %6 : vector<1x256xi1>, vector<1x256xi32>
    %19 = vector.extract_strided_slice %1 {offsets = [0, 0], sizes = [12, 256], strides = [1, 1]} : vector<12x290xbf16> to vector<12x256xbf16>
    %c1_i32_5 = arith.constant 1 : i32
    %20 = vector.broadcast %c1_i32_5 : i32 to vector<1x256xi32>
    %21 = arith.cmpi sge, %18, %20 : vector<1x256xi32>
    %cst = arith.constant 0.000000e+00 : bf16
    %22 = vector.broadcast %cst : bf16 to vector<12x256xbf16>
    %23 = vector.shape_cast %21 : vector<1x256xi1> to vector<1x256xi1>
    %24 = vector.broadcast %23 : vector<1x256xi1> to vector<12x256xi1>
    %25 = arith.select %24, %19, %22 : vector<12x256xi1>, vector<12x256xbf16>
    %26 = vector.extract_strided_slice %1 {offsets = [0, 1], sizes = [12, 256], strides = [1, 1]} : vector<12x290xbf16> to vector<12x256xbf16>
    %27 = vector.extract_strided_slice %1 {offsets = [0, 2], sizes = [12, 256], strides = [1, 1]} : vector<12x290xbf16> to vector<12x256xbf16>
    %c15_i32 = arith.constant 15 : i32
    %28 = vector.broadcast %c15_i32 : i32 to vector<1x256xi32>
    %29 = arith.cmpi slt, %18, %28 : vector<1x256xi32>
    %cst_6 = arith.constant 0.000000e+00 : bf16
    %30 = vector.broadcast %cst_6 : bf16 to vector<12x256xbf16>
    %31 = vector.shape_cast %29 : vector<1x256xi1> to vector<1x256xi1>
    %32 = vector.broadcast %31 : vector<1x256xi1> to vector<12x256xi1>
    %33 = arith.select %32, %27, %30 : vector<12x256xi1>, vector<12x256xbf16>
    %34 = vector.extract_strided_slice %1 {offsets = [0, 16], sizes = [12, 256], strides = [1, 1]} : vector<12x290xbf16> to vector<12x256xbf16>
    %c1_i32_7 = arith.constant 1 : i32
    %35 = vector.broadcast %c1_i32_7 : i32 to vector<1x256xi32>
    %36 = arith.cmpi sge, %18, %35 : vector<1x256xi32>
    %cst_8 = arith.constant 0.000000e+00 : bf16
    %37 = vector.broadcast %cst_8 : bf16 to vector<12x256xbf16>
    %38 = vector.shape_cast %36 : vector<1x256xi1> to vector<1x256xi1>
    %39 = vector.broadcast %38 : vector<1x256xi1> to vector<12x256xi1>
    %40 = arith.select %39, %34, %37 : vector<12x256xi1>, vector<12x256xbf16>
    %41 = vector.extract_strided_slice %1 {offsets = [0, 17], sizes = [12, 256], strides = [1, 1]} : vector<12x290xbf16> to vector<12x256xbf16>
    %42 = vector.extract_strided_slice %1 {offsets = [0, 18], sizes = [12, 256], strides = [1, 1]} : vector<12x290xbf16> to vector<12x256xbf16>
    %c15_i32_9 = arith.constant 15 : i32
    %43 = vector.broadcast %c15_i32_9 : i32 to vector<1x256xi32>
    %44 = arith.cmpi slt, %18, %43 : vector<1x256xi32>
    %cst_10 = arith.constant 0.000000e+00 : bf16
    %45 = vector.broadcast %cst_10 : bf16 to vector<12x256xbf16>
    %46 = vector.shape_cast %44 : vector<1x256xi1> to vector<1x256xi1>
    %47 = vector.broadcast %46 : vector<1x256xi1> to vector<12x256xi1>
    %48 = arith.select %47, %42, %45 : vector<12x256xi1>, vector<12x256xbf16>
    %49 = vector.extract_strided_slice %1 {offsets = [0, 32], sizes = [12, 256], strides = [1, 1]} : vector<12x290xbf16> to vector<12x256xbf16>
    %c1_i32_11 = arith.constant 1 : i32
    %50 = vector.broadcast %c1_i32_11 : i32 to vector<1x256xi32>
    %51 = arith.cmpi sge, %18, %50 : vector<1x256xi32>
    %cst_12 = arith.constant 0.000000e+00 : bf16
    %52 = vector.broadcast %cst_12 : bf16 to vector<12x256xbf16>
    %53 = vector.shape_cast %51 : vector<1x256xi1> to vector<1x256xi1>
    %54 = vector.broadcast %53 : vector<1x256xi1> to vector<12x256xi1>
    %55 = arith.select %54, %49, %52 : vector<12x256xi1>, vector<12x256xbf16>
    %56 = vector.extract_strided_slice %1 {offsets = [0, 33], sizes = [12, 256], strides = [1, 1]} : vector<12x290xbf16> to vector<12x256xbf16>
    %57 = vector.extract_strided_slice %1 {offsets = [0, 34], sizes = [12, 256], strides = [1, 1]} : vector<12x290xbf16> to vector<12x256xbf16>
    %c15_i32_13 = arith.constant 15 : i32
    %58 = vector.broadcast %c15_i32_13 : i32 to vector<1x256xi32>
    %59 = arith.cmpi slt, %18, %58 : vector<1x256xi32>
    %cst_14 = arith.constant 0.000000e+00 : bf16
    %60 = vector.broadcast %cst_14 : bf16 to vector<12x256xbf16>
    %61 = vector.shape_cast %59 : vector<1x256xi1> to vector<1x256xi1>
    %62 = vector.broadcast %61 : vector<1x256xi1> to vector<12x256xi1>
    %63 = arith.select %62, %57, %60 : vector<12x256xi1>, vector<12x256xbf16>
    %cst_15 = arith.constant 1.000000e+00 : bf16
    %64 = vector.broadcast %cst_15 : bf16 to vector<1x256xbf16>
    %cst_16 = arith.constant 0.000000e+00 : bf16
    %65 = vector.broadcast %cst_16 : bf16 to vector<19x256xbf16>
    %66 = tpu.concatenate %25, %26, %33, %40, %41, %48, %55, %56, %63, %64, %65 in 0 : vector<12x256xbf16>, vector<12x256xbf16>, vector<12x256xbf16>, vector<12x256xbf16>, vector<12x256xbf16>, vector<12x256xbf16>, vector<12x256xbf16>, vector<12x256xbf16>, vector<12x256xbf16>, vector<1x256xbf16>, vector<19x256xbf16> -> vector<128x256xbf16>
    %c0_17 = arith.constant 0 : index
    %c0_18 = arith.constant 0 : index
    %67 = vector.load %arg3[%c0_17, %c0_18] : memref<32x128xbf16, #tpu.memory_space<vmem>>, vector<32x128xbf16>
    %cst_19 = arith.constant dense<0.000000e+00> : vector<32x256xf32>
    %68 = tpu.matmul %67, %66, %cst_19 {dimension_numbers = #tpu.dot_dimension_numbers<[1], [0], [0], [1], [0, 0, 1, 1], [], []>} : vector<32x128xbf16>, vector<128x256xbf16>, vector<32x256xf32> -> vector<32x256xf32>
    %69 = vector.extract_strided_slice %68 {offsets = [0, 0], sizes = [24, 256], strides = [1, 1]} : vector<32x256xf32> to vector<24x256xf32>
    %70 = arith.negf %69 : vector<24x256xf32>
    %71 = math.exp %70 : vector<24x256xf32>
    %cst_20 = arith.constant 1.000000e+00 : f32
    %72 = vector.broadcast %cst_20 : f32 to vector<24x256xf32>
    %73 = arith.addf %72, %71 : vector<24x256xf32>
    %74 = arith.divf %72, %73 : vector<24x256xf32>
    %75 = vector.extract_strided_slice %74 {offsets = [0, 0], sizes = [8, 256], strides = [1, 1]} : vector<24x256xf32> to vector<8x256xf32>
    %76 = vector.extract_strided_slice %74 {offsets = [8, 0], sizes = [8, 256], strides = [1, 1]} : vector<24x256xf32> to vector<8x256xf32>
    %77 = vector.extract_strided_slice %74 {offsets = [16, 0], sizes = [8, 256], strides = [1, 1]} : vector<24x256xf32> to vector<8x256xf32>
    %78 = vector.extract_strided_slice %68 {offsets = [24, 0], sizes = [8, 256], strides = [1, 1]} : vector<32x256xf32> to vector<8x256xf32>
    %79 = math.tanh %78 : vector<8x256xf32>
    %c0_21 = arith.constant 0 : index
    %c0_22 = arith.constant 0 : index
    %c0_23 = arith.constant 0 : index
    %80 = vector.load %arg2[%c0_21, %c0_22, %c0_23] : memref<1x8x256xf32, #tpu.memory_space<vmem>>, vector<1x8x256xf32>
    %81 = vector.shape_cast %80 : vector<1x8x256xf32> to vector<8x256xf32>
    %82 = arith.mulf %76, %81 : vector<8x256xf32>
    %83 = arith.mulf %75, %79 : vector<8x256xf32>
    %84 = arith.addf %82, %83 : vector<8x256xf32>
    %85 = math.tanh %84 : vector<8x256xf32>
    %86 = arith.mulf %77, %85 : vector<8x256xf32>
    %87 = arith.truncf %86 : vector<8x256xf32> to vector<8x256xbf16>
    %c0_24 = arith.constant 0 : index
    %c0_25 = arith.constant 0 : index
    %c0_26 = arith.constant 0 : index
    %88 = vector.load %arg4[%c0_24, %c0_25, %c0_26] : memref<1x8x256xbf16, #tpu.memory_space<vmem>>, vector<1x8x256xbf16>
    %89 = vector.shape_cast %88 : vector<1x8x256xbf16> to vector<8x256xbf16>
    %90 = vector.shape_cast %87 : vector<8x256xbf16> to vector<1x8x256xbf16>
    tpu.vector_store %arg4[%c0_24, %c0_25, %c0_26], %90 {strides = array<i32>} : memref<1x8x256xbf16, #tpu.memory_space<vmem>>, vector<1x8x256xbf16>,
    %c0_27 = arith.constant 0 : index
    %c0_28 = arith.constant 0 : index
    %c0_29 = arith.constant 0 : index
    %91 = vector.load %arg5[%c0_27, %c0_28, %c0_29] : memref<1x8x256xf32, #tpu.memory_space<vmem>>, vector<1x8x256xf32>
    %92 = vector.shape_cast %91 : vector<1x8x256xf32> to vector<8x256xf32>
    %93 = vector.shape_cast %84 : vector<8x256xf32> to vector<1x8x256xf32>
    tpu.vector_store %arg5[%c0_27, %c0_28, %c0_29], %93 {strides = array<i32>} : memref<1x8x256xf32, #tpu.memory_space<vmem>>, vector<1x8x256xf32>,
    return
  }
  func.func @transform_0(%arg0: i32) -> (i32, i32, i32) {
    %c0_i32 = arith.constant 0 : i32
    %c0_i32_0 = arith.constant 0 : i32
    %c0_i32_1 = arith.constant 0 : i32
    return %arg0, %c0_i32, %c0_i32_0 : i32, i32, i32
  }
  func.func @transform_1(%arg0: i32) -> (i32, i32, i32) {
    %c0_i32 = arith.constant 0 : i32
    %c0_i32_0 = arith.constant 0 : i32
    %c0_i32_1 = arith.constant 0 : i32
    return %arg0, %c0_i32, %c0_i32_0 : i32, i32, i32
  }
  func.func @transform_2(%arg0: i32) -> (i32, i32) {
    %c0_i32 = arith.constant 0 : i32
    %c0_i32_0 = arith.constant 0 : i32
    %c0_i32_1 = arith.constant 0 : i32
    return %c0_i32, %c0_i32_0 : i32, i32
  }
  func.func @transform_3(%arg0: i32) -> (i32, i32, i32) {
    %c0_i32 = arith.constant 0 : i32
    %c0_i32_0 = arith.constant 0 : i32
    %c0_i32_1 = arith.constant 0 : i32
    return %arg0, %c0_i32, %c0_i32_0 : i32, i32, i32
  }
  func.func @transform_4(%arg0: i32) -> (i32, i32, i32) {
    %c0_i32 = arith.constant 0 : i32
    %c0_i32_0 = arith.constant 0 : i32
    %c0_i32_1 = arith.constant 0 : i32
    return %arg0, %c0_i32, %c0_i32_0 : i32, i32, i32
  }
}

</mosaic_0001>

<llo_original>
// kernel: tpu_custom_call.1
$region0: #{tpu_custom_call.1}
  #allocation0 [shape = 'u32[]', space=smem, size = 0x4, offset = 0x4, fixed_abs, tag = 'smem constant byte address 0x4 - core index']
  #allocation1 [shape = 'u32[72,128]{1,0:T(1,128)}', space=vmem, size = 0x9000, scoped, tag = 'internal scratch']
  %s0 = inlined_call_operand.vmem [shape: bf16[2,12,290], index: 0, kind: input, shape index: {}]
  %s1 = inlined_call_operand.vmem [shape: f32[2,8,256], index: 1, kind: input, shape index: {}]
  %s2 = inlined_call_operand.vmem [shape: bf16[32,128], index: 2, kind: input, shape index: {}]
  %s3 = inlined_call_operand.hbm [shape: bf16[2,8,256], index: 3, kind: output, shape index: {0}]
  %s4 = inlined_call_operand.hbm [shape: f32[2,8,256], index: 4, kind: output, shape index: {1}]
  %5 = xla_tuple %s3, %s4
  %s6 = sld [smem:[#allocation0]]
  $region53: #{tpu_custom_call.1} parent=0
    _
  %s8 = ssub.s32 1, %s6
  %s9 = scalar_select 0, %s8, %s6
  $region1: #{tpu_custom_call.1} parent=0
    #allocation2 [shape = 'u8[8192]{0}', space=vmem, size = 0x2000, scoped, tag = 'output window, operand 0']
    #allocation3 [shape = 's32[2]{0}', space=sflag, size = 0x8, scoped, tag = 'scoped memory for tpu_custom_call.1']
    #allocation4 [shape = 'u8[16384]{0}', space=vmem, size = 0x4000, scoped, tag = 'output window, operand 1']
    #allocation5 [shape = 's32[2]{0}', space=sflag, size = 0x8, scoped, tag = 'scoped memory for tpu_custom_call.1']
    %10 = vsyncpa [#allocation3], 0
    %s11 = scalar_lea.sflag [#allocation3], 1
    %12 = vsyncpa %s11, 0
    %13 = vsyncpa [#allocation5], 0
    %s14 = scalar_lea.sflag [#allocation5], 1
    %15 = vsyncpa %s14, 0
    loop: start=0, step=1, limit=4
    $region2: #{tpu_custom_call.1} parent=1 // loop_pre_header
      _
    $region3: #{tpu_custom_call.1} parent=1 // loop_header
      %s17 = sphi 0, %s21
      %p18 = scmp.ge.s32.totalorder %s17, 4
      %s27 = sphi 0, %s29
      %s30 = sphi 0, %s27
      %s31 = sphi 0, %s30
      %s47 = sphi 0, %s31
      %s53 = sphi 0, %s55
      %s56 = sphi 0, %s53
      %s57 = sphi 0, %s56
      %s73 = sphi 0, %s57
      %s77 = sphi 0, %s77
      %s79 = sphi 0, %s77
      %s80 = sphi 0, %s79
      %s94 = sphi 0, %s80
      %s100 = sphi 0, %s102
      %s103 = sphi 0, %s100
      %s104 = sphi 0, %s103
      %s120 = sphi 0, %s104
      %s126 = sphi 0, %s128
      %s129 = sphi 0, %s126
      %s130 = sphi 0, %s129
      %s146 = sphi 0, %s130
    $region4: #{tpu_custom_call.1} parent=1 // loop_header_branch
      %20 = sbr.rel (%p18) target = $region8
    $region5: #{tpu_custom_call.1} parent=1 // loop_body
      %s22 = ssub.s32 %s17, 1
      %s23 = ssub.s32 %s17, 2
      %s24 = sadd.s32 %s17, 1
      %s25 = ssub.s32 %s17, %s24
      %p26 = scmp.eq.s32.totalorder %s25, 0
      %s28 = sadd.s32 %s27, 1
      %s29 = scalar_select %p26, %s27, %s28
      %p32 = pneg %p26
      %p33 = scmp.eq.s32.totalorder %s17, 1
      %p34 = por %p32, %p33
      %p35 = scmp.ne.s32.totalorder %s27, %s30
      %p36 = scmp.eq.s32.totalorder %s17, 0
      %p37 = por %p35, %p36
      %p38 = scmp.ne.s32.totalorder %s27, %s30
      %p39 = scmp.eq.s32.totalorder %s22, 1
      %p40 = por %p38, %p39
      %p41 = scmp.ne.s32.totalorder %s30, %s31
      %p42 = scmp.eq.s32.totalorder %s22, 0
      %p43 = por %p41, %p42
      %p44 = scmp.ne.s32.totalorder %s30, %s31
      %p45 = scmp.eq.s32.totalorder %s23, 1
      %p46 = por %p44, %p45
      %p48 = scmp.ne.s32.totalorder %s31, %s47
      %p49 = scmp.eq.s32.totalorder %s23, 0
      %p50 = por %p48, %p49
      %s51 = ssub.s32 %s17, %s24
      %p52 = scmp.eq.s32.totalorder %s51, 0
      %s54 = sadd.s32 %s53, 1
      %s55 = scalar_select %p52, %s53, %s54
      %p58 = pneg %p52
      %p59 = scmp.eq.s32.totalorder %s17, 1
      %p60 = por %p58, %p59
      %p61 = scmp.ne.s32.totalorder %s53, %s56
      %p62 = scmp.eq.s32.totalorder %s17, 0
      %p63 = por %p61, %p62
      %p64 = scmp.ne.s32.totalorder %s53, %s56
      %p65 = scmp.eq.s32.totalorder %s22, 1
      %p66 = por %p64, %p65
      %p67 = scmp.ne.s32.totalorder %s56, %s57
      %p68 = scmp.eq.s32.totalorder %s22, 0
      %p69 = por %p67, %p68
      %p70 = scmp.ne.s32.totalorder %s56, %s57
      %p71 = scmp.eq.s32.totalorder %s23, 1
      %p72 = por %p70, %p71
      %p74 = scmp.ne.s32.totalorder %s57, %s73
      %p75 = scmp.eq.s32.totalorder %s23, 0
      %p76 = por %p74, %p75
      %s78 = sadd.s32 %s77, 1
      %p81 = scmp.eq.s32.totalorder %s17, 1
      %p82 = scmp.ne.s32.totalorder %s77, %s79
      %p83 = scmp.eq.s32.totalorder %s17, 0
      %p84 = por %p82, %p83
      %p85 = scmp.ne.s32.totalorder %s77, %s79
      %p86 = scmp.eq.s32.totalorder %s22, 1
      %p87 = por %p85, %p86
      %p88 = scmp.ne.s32.totalorder %s79, %s80
      %p89 = scmp.eq.s32.totalorder %s22, 0
      %p90 = por %p88, %p89
      %p91 = scmp.ne.s32.totalorder %s79, %s80
      %p92 = scmp.eq.s32.totalorder %s23, 1
      %p93 = por %p91, %p92
      %p95 = scmp.ne.s32.totalorder %s80, %s94
      %p96 = scmp.eq.s32.totalorder %s23, 0
      %p97 = por %p95, %p96
      %s98 = ssub.s32 %s17, %s24
      %p99 = scmp.eq.s32.totalorder %s98, 0
      %s101 = sadd.s32 %s100, 1
      %s102 = scalar_select %p99, %s100, %s101
      %p105 = pneg %p99
      %p106 = scmp.eq.s32.totalorder %s17, 1
      %p107 = por %p105, %p106
      %p108 = scmp.ne.s32.totalorder %s100, %s103
      %p109 = scmp.eq.s32.totalorder %s17, 0
      %p110 = por %p108, %p109
      %p111 = scmp.ne.s32.totalorder %s100, %s103
      %p112 = scmp.eq.s32.totalorder %s22, 1
      %p113 = por %p111, %p112
      %p114 = scmp.ne.s32.totalorder %s103, %s104
      %p115 = scmp.eq.s32.totalorder %s22, 0
      %p116 = por %p114, %p115
      %p117 = scmp.ne.s32.totalorder %s103, %s104
      %p118 = scmp.eq.s32.totalorder %s23, 1
      %p119 = por %p117, %p118
      %p121 = scmp.ne.s32.totalorder %s104, %s120
      %p122 = scmp.eq.s32.totalorder %s23, 0
      %p123 = por %p121, %p122
      %s124 = ssub.s32 %s17, %s24
      %p125 = scmp.eq.s32.totalorder %s124, 0
      %s127 = sadd.s32 %s126, 1
      %s128 = scalar_select %p125, %s126, %s127
      %p131 = pneg %p125
      %p132 = scmp.eq.s32.totalorder %s17, 1
      %p133 = por %p131, %p132
      %p134 = scmp.ne.s32.totalorder %s126, %s129
      %p135 = scmp.eq.s32.totalorder %s17, 0
      %p136 = por %p134, %p135
      %p137 = scmp.ne.s32.totalorder %s126, %s129
      %p138 = scmp.eq.s32.totalorder %s22, 1
      %p139 = por %p137, %p138
      %p140 = scmp.ne.s32.totalorder %s129, %s130
      %p141 = scmp.eq.s32.totalorder %s22, 0
      %p142 = por %p140, %p141
      %p143 = scmp.ne.s32.totalorder %s129, %s130
      %p144 = scmp.eq.s32.totalorder %s23, 1
      %p145 = por %p143, %p144
      %p147 = scmp.ne.s32.totalorder %s130, %s146
      %p148 = scmp.eq.s32.totalorder %s23, 0
      %p149 = por %p147, %p148
      %p150 = scmp.le.s32.totalorder 1, %s17
      %p151 = scmp.lt.s32.totalorder %s17, 3
      %p152 = pnand %p150, %p151
      %p153 = pneg %p152
      // Predicated region
      $region9: #{tpu_custom_call.1} parent=5 // pred_check
        _
      $region10: #{tpu_custom_call.1} parent=5 // pred_check_branch
        %155 = sbr.rel (%p152) target = $region12
      $region11: #{tpu_custom_call.1} parent=5 // pred_region
        %s156 = ssub.s32 %s17, 1
        // Predicated region
        $region13: #{tpu_custom_call.1} parent=11 // pred_check
          %p157 = pneg %p90
        $region14: #{tpu_custom_call.1} parent=11 // pred_check_branch
          %159 = sbr.rel (%p157) target = $region16
        $region15: #{tpu_custom_call.1} parent=11 // pred_region
          _
        $region16: #{tpu_custom_call.1} parent=11 // pred_fallthru
          _
      $region12: #{tpu_custom_call.1} parent=5 // pred_fallthru
        _
      %p160 = scmp.lt.s32.totalorder %s17, 2
      // Predicated region
      $region17: #{tpu_custom_call.1} parent=5 // pred_check
        %p161 = pneg %p160
      $region18: #{tpu_custom_call.1} parent=5 // pred_check_branch
        %163 = sbr.rel (%p161) target = $region20
      $region19: #{tpu_custom_call.1} parent=5 // pred_region
        // Predicated region
        $region21: #{tpu_custom_call.1} parent=19 // pred_check
          %p164 = pneg %p37
        $region22: #{tpu_custom_call.1} parent=19 // pred_check_branch
          %166 = sbr.rel (%p164) target = $region24
        $region23: #{tpu_custom_call.1} parent=19 // pred_region
          %p167 = scmp.lt.s32.totalorder %s17, 1
          %s168 = scalar_select %p167, %s17, 1
          %s169 = smul.addr %s168, 6
          %s170 = smul.addr %s169, 4
          %s171 = scalar_lea.vmem %s0, %s170
        $region24: #{tpu_custom_call.1} parent=19 // pred_fallthru
          _
        // Predicated region
        $region25: #{tpu_custom_call.1} parent=19 // pred_check
          %p172 = pneg %p63
        $region26: #{tpu_custom_call.1} parent=19 // pred_check_branch
          %174 = sbr.rel (%p172) target = $region28
        $region27: #{tpu_custom_call.1} parent=19 // pred_region
          %p175 = scmp.lt.s32.totalorder %s17, 1
          %s176 = scalar_select %p175, %s17, 1
          %s177 = smul.addr %s176, 2
          %s178 = smul.addr %s177, 8
          %s179 = scalar_lea.vmem %s1, %s178
        $region28: #{tpu_custom_call.1} parent=19 // pred_fallthru
          _
      $region20: #{tpu_custom_call.1} parent=5 // pred_fallthru
        _
      %p180 = scmp.le.s32.totalorder 1, %s17
      %p181 = scmp.lt.s32.totalorder %s17, 3
      %p182 = pnand %p180, %p181
      %p183 = pneg %p182
      // Predicated region
      $region29: #{tpu_custom_call.1} parent=5 // pred_check
        _
      $region30: #{tpu_custom_call.1} parent=5 // pred_check_branch
        %185 = sbr.rel (%p182) target = $region32
      $region31: #{tpu_custom_call.1} parent=5 // pred_region
        %s186 = ssub.s32 %s17, 1
        %p187 = scmp.lt.s32.totalorder %s22, 1
        %s188 = scalar_select %p187, %s22, 1
        %s189 = smul.addr %s188, 6
        %s190 = smul.addr %s189, 4
        %s191 = scalar_lea.vmem %s0, %s190
        %p192 = pneg %p43
        %p193 = pneg %p40
        %p194 = scmp.lt.s32.totalorder %s22, 1
        %s195 = scalar_select %p194, %s22, 1
        %s196 = smul.addr %s195, 2
        %s197 = smul.addr %s196, 8
        %s198 = scalar_lea.vmem %s1, %s197
        %p199 = pneg %p69
        %p200 = pneg %p66
        %p201 = pneg %p90
        %p202 = pneg %p87
        %p203 = pneg %p116
        %p204 = pneg %p113
        %s205 = sand.u32 %s103, 1
        %s206 = scalar_lea.sflag [#allocation3], %s205
        %s207 = sand.u32 %s103, 1
        %s208 = smul.addr %s207, 8
        %s209 = scalar_lea.vmem [#allocation2], %s208
        %p210 = pneg %p142
        %p211 = pneg %p139
        %s212 = sand.u32 %s129, 1
        %s213 = scalar_lea.sflag [#allocation5], %s212
        %s214 = sand.u32 %s129, 1
        %s215 = smul.addr %s214, 16
        %s216 = scalar_lea.vmem [#allocation4], %s215
        %p217 = scmp.lt.s32.totalorder %s22, 1
        %s218 = scalar_select %p217, %s22, 1
        %s219 = smul.addr %s218, 6
        %s220 = smul.addr %s219, 4
        %s221 = scalar_lea.vmem %s0, %s220
        %p222 = scmp.lt.s32.totalorder %s22, 1
        %s223 = scalar_select %p222, %s22, 1
        %s224 = smul.addr %s223, 2
        %s225 = smul.addr %s224, 8
        %s226 = scalar_lea.vmem %s1, %s225
        %v231 = vld [vmem:[%s221] sm:$0xff]
        %v232 = vld [vmem:[%s221 + $0x8] sm:$0xf]
        %v233 = vld [vmem:[%s221 + $0xc] sm:$0x33]
        %v234 = vld [vmem:[%s221 + $0x14] sm:$0x3]
        %v235 = vlaneseq
        %v236 = vand.u32 %v235, 127
        %v237 = vadd.s32 %v236, 128
        %vm238 = vcmp.lt.s32.totalorder %v236, 0
        %v239 = vsub.s32 0, %v236
        %v240 = vsel %vm238, %v239, %v236
        %v241 = vshrl.u32 %v240, 4
        %v242 = vand.u32 %v240, 15
        %v243 = vsub.s32 0, %v242
        %v244 = vsel %vm238, %v243, %v242
        %vm245 = vcmp.lt.s32.totalorder %v237, 0
        %v246 = vsub.s32 0, %v237
        %v247 = vsel %vm245, %v246, %v237
        %v248 = vshrl.u32 %v247, 4
        %v249 = vand.u32 %v247, 15
        %v250 = vsub.s32 0, %v249
        %v251 = vsel %vm245, %v250, %v249
        %vm252 = vcmp.ne.s32.totalorder %v244, 0
        %vm253 = vcmp.ne.s32.totalorder %v251, 0
        %vm254 = vcmp.lt.s32.totalorder %v244, 0
        %vm255 = vcmp.lt.s32.totalorder %v251, 0
        %vm256 = vmand %vm254, %vm252
        %vm257 = vmand %vm255, %vm253
        %v258 = vadd.s32 %v244, 16
        %v259 = vadd.s32 %v251, 16
        %v260 = vsel %vm256, %v258, %v244
        %v261 = vsel %vm257, %v259, %v251
        %vm262 = vcmp.ge.s32.totalorder %v260, 1
        %vm263 = vcmp.ge.s32.totalorder %v261, 1
        %v264 = vsel %vm262, 1, 0
        %v265 = vsel %vm263, 1, 0
        %vm266 = vcmp.eq.s32.totalorder %v264, 1
        %vm267 = vcmp.eq.s32.totalorder %v265, 1
        %vm268 = vmpackc.low %vm267, %vm266
        %v269 = vsel %vm268, %v231, 0
        %v270 = vsel %vm268, %v233, 0
        %vm271 = vcmp.lt.s32.totalorder %v260, 15
        %vm272 = vcmp.lt.s32.totalorder %v261, 15
        %v273 = vsel %vm271, 1, 0
        %v274 = vsel %vm272, 1, 0
        %vm275 = vcmp.eq.s32.totalorder %v273, 1
        %vm276 = vcmp.eq.s32.totalorder %v274, 1
        %vm277 = vmpackc.low %vm276, %vm275
        %v278 = vsel %vm277, 65537, 0
        %279 = vrot.lane.b32.xlu0 %v278, 2
        %v280 = vpop.permute.xlu0 %279
        %v281 = vrot.slane %v280, 4
        %vm282 = vcmask 15360
        %v283 = vsel %vm282, %v281, %v280
        %v284 = vunpack.c.l.b16 %v283
        %v285 = vunpack.c.h.b16 %v283
        %v286 = vunpack.c.l.b16 0
        %v287 = vunpack.c.h.b16 0
        %vm288 = vcmp.ne.s32.totalorder %v284, %v286
        %vm289 = vcmp.ne.s32.totalorder %v285, %v287
        %vm290 = vmpackc.low %vm289, %vm288
        %v291 = vunpack.c.l.b16 %v281
        %v292 = vunpack.c.h.b16 %v281
        %v293 = vunpack.c.l.b16 0
        %v294 = vunpack.c.h.b16 0
        %vm295 = vcmp.ne.s32.totalorder %v291, %v293
        %vm296 = vcmp.ne.s32.totalorder %v292, %v294
        %vm297 = vmpackc.low %vm296, %vm295
        %v298 = vsel %vm290, %v231, 0
        %v299 = vsel %vm297, %v232, 0
        %v300 = vsel %vm290, %v233, 0
        %v301 = vsel %vm297, %v234, 0
        %v302 = vsel %vm268, 65537, 0
        %303 = vrot.lane.b32.xlu0 %v302, 16
        %v304 = vpop.permute.xlu0 %303
        %v305 = vrot.slane %v304, 4
        %vm306 = vcmask 130048
        %v307 = vsel %vm306, %v305, %v304
        %v308 = vunpack.c.l.b16 %v307
        %v309 = vunpack.c.h.b16 %v307
        %v310 = vunpack.c.l.b16 0
        %v311 = vunpack.c.h.b16 0
        %vm312 = vcmp.ne.s32.totalorder %v308, %v310
        %vm313 = vcmp.ne.s32.totalorder %v309, %v311
        %vm314 = vmpackc.low %vm313, %vm312
        %v315 = vunpack.c.l.b16 %v305
        %v316 = vunpack.c.h.b16 %v305
        %v317 = vunpack.c.l.b16 0
        %v318 = vunpack.c.h.b16 0
        %vm319 = vcmp.ne.s32.totalorder %v315, %v317
        %vm320 = vcmp.ne.s32.totalorder %v316, %v318
        %vm321 = vmpackc.low %vm320, %vm319
        %v322 = vsel %vm314, %v231, 0
        %v323 = vsel %vm321, %v232, 0
        %v324 = vsel %vm314, %v233, 0
        %v325 = vsel %vm321, %v234, 0
        %326 = vrot.lane.b32.xlu0 %v278, 18
        %v327 = vpop.permute.xlu0 %326
        %v328 = vrot.slane %v327, 4
        %vm329 = vcmask 146432
        %v330 = vsel %vm329, %v328, %v327
        %v331 = vunpack.c.l.b16 %v330
        %v332 = vunpack.c.h.b16 %v330
        %v333 = vunpack.c.l.b16 0
        %v334 = vunpack.c.h.b16 0
        %vm335 = vcmp.ne.s32.totalorder %v331, %v333
        %vm336 = vcmp.ne.s32.totalorder %v332, %v334
        %vm337 = vmpackc.low %vm336, %vm335
        %v338 = vunpack.c.l.b16 %v328
        %v339 = vunpack.c.h.b16 %v328
        %v340 = vunpack.c.l.b16 0
        %v341 = vunpack.c.h.b16 0
        %vm342 = vcmp.ne.s32.totalorder %v338, %v340
        %vm343 = vcmp.ne.s32.totalorder %v339, %v341
        %vm344 = vmpackc.low %vm343, %vm342
        %v345 = vsel %vm337, %v231, 0
        %v346 = vsel %vm344, %v232, 0
        %v347 = vsel %vm337, %v233, 0
        %v348 = vsel %vm344, %v234, 0
        %349 = vrot.lane.b32.xlu0 %v302, 32
        %v350 = vpop.permute.xlu0 %349
        %v351 = vrot.slane %v350, 4
        %vm352 = vcmask 261120
        %v353 = vsel %vm352, %v351, %v350
        %v354 = vunpack.c.l.b16 %v353
        %v355 = vunpack.c.h.b16 %v353
        %v356 = vunpack.c.l.b16 0
        %v357 = vunpack.c.h.b16 0
        %vm358 = vcmp.ne.s32.totalorder %v354, %v356
        %vm359 = vcmp.ne.s32.totalorder %v355, %v357
        %vm360 = vmpackc.low %vm359, %vm358
        %v361 = vunpack.c.l.b16 %v351
        %v362 = vunpack.c.h.b16 %v351
        %v363 = vunpack.c.l.b16 0
        %v364 = vunpack.c.h.b16 0
        %vm365 = vcmp.ne.s32.totalorder %v361, %v363
        %vm366 = vcmp.ne.s32.totalorder %v362, %v364
        %vm367 = vmpackc.low %vm366, %vm365
        %v368 = vsel %vm360, %v231, 0
        %v369 = vsel %vm367, %v232, 0
        %v370 = vsel %vm360, %v233, 0
        %v371 = vsel %vm367, %v234, 0
        %372 = vrot.lane.b32.xlu0 %v278, 34
        %v373 = vpop.permute.xlu0 %372
        %v374 = vrot.slane %v373, 4
        %vm375 = vcmask 277504
        %v376 = vsel %vm375, %v374, %v373
        %v377 = vunpack.c.l.b16 %v376
        %v378 = vunpack.c.h.b16 %v376
        %v379 = vunpack.c.l.b16 0
        %v380 = vunpack.c.h.b16 0
        %vm381 = vcmp.ne.s32.totalorder %v377, %v379
        %vm382 = vcmp.ne.s32.totalorder %v378, %v380
        %vm383 = vmpackc.low %vm382, %vm381
        %v384 = vunpack.c.l.b16 %v374
        %v385 = vunpack.c.h.b16 %v374
        %v386 = vunpack.c.l.b16 0
        %v387 = vunpack.c.h.b16 0
        %vm388 = vcmp.ne.s32.totalorder %v384, %v386
        %vm389 = vcmp.ne.s32.totalorder %v385, %v387
        %vm390 = vmpackc.low %vm389, %vm388
        %v391 = vsel %vm383, %v231, 0
        %v392 = vsel %vm390, %v232, 0
        %v393 = vsel %vm383, %v233, 0
        %v394 = vsel %vm390, %v234, 0
        %v397 = vunpack.c.l.b16 %v269
        %v398 = vunpack.c.h.b16 %v269
        %v399 = vunpack.c.l.b16 %v270
        %v400 = vunpack.c.h.b16 %v270
        %v401 = vpack.c.b16 %v399, %v397
        %v402 = vpack.c.b16 %v400, %v398
        %v407 = vunpack.c.l.b16 %v231
        %v408 = vunpack.c.h.b16 %v231
        %v409 = vunpack.c.l.b16 %v232
        %v410 = vunpack.c.l.b16 %v233
        %v411 = vunpack.c.h.b16 %v233
        %v412 = vunpack.c.l.b16 %v234
        %v413 = vpack.c.b16 %v410, %v407
        %v414 = vpack.c.b16 %v411, %v408
        %v415 = vpack.c.b16 %v412, %v409
        %v416 = vrot.slane %v413, 2
        %v417 = vrot.slane %v414, 2
        %v418 = vrot.slane %v415, 2
        %419 = vrot.lane.b32.xlu0 %v416, 127
        %v420 = vpop.permute.xlu0 %419
        %421 = vrot.lane.b32.xlu0 %v417, 127
        %v422 = vpop.permute.xlu0 %421
        %423 = vrot.lane.b32.xlu0 %v418, 127
        %v424 = vpop.permute.xlu0 %423
        %vm425 = vcmask 1039360
        %v426 = vsel %vm425, %v420, %v422
        %v427 = vsel %vm425, %v422, %v424
        %v432 = vunpack.c.l.b16 %v298
        %v433 = vunpack.c.h.b16 %v298
        %v434 = vunpack.c.l.b16 %v299
        %v435 = vunpack.c.l.b16 %v300
        %v436 = vunpack.c.h.b16 %v300
        %v437 = vunpack.c.l.b16 %v301
        %v438 = vpack.c.b16 %v432, %v432
        %v439 = vpack.c.b16 %v433, %v433
        %v440 = vpack.c.b16 %v434, %v434
        %v441 = vpack.c.b16 %v435, %v435
        %v442 = vpack.c.b16 %v436, %v436
        %v443 = vpack.c.b16 %v437, %v437
        %444 = vrot.lane.b32.xlu0 %v438, 126
        %v445 = vpop.permute.xlu0 %444
        %446 = vrot.lane.b32.xlu0 %v439, 126
        %v447 = vpop.permute.xlu0 %446
        %448 = vrot.lane.b32.xlu0 %v440, 126
        %v449 = vpop.permute.xlu0 %448
        %450 = vrot.lane.b32.xlu0 %v441, 126
        %v451 = vpop.permute.xlu0 %450
        %452 = vrot.lane.b32.xlu0 %v442, 126
        %v453 = vpop.permute.xlu0 %452
        %454 = vrot.lane.b32.xlu0 %v443, 126
        %v455 = vpop.permute.xlu0 %454
        %vm456 = vcmask 1031168
        %v457 = vsel %vm456, %v445, %v447
        %v458 = vsel %vm456, %v447, %v449
        %v459 = vsel %vm456, %v451, %v453
        %v460 = vsel %vm456, %v453, %v455
        %v465 = vunpack.c.l.b16 %v322
        %v466 = vunpack.c.h.b16 %v322
        %v467 = vunpack.c.l.b16 %v323
        %v468 = vunpack.c.l.b16 %v324
        %v469 = vunpack.c.h.b16 %v324
        %v470 = vunpack.c.l.b16 %v325
        %v471 = vpack.c.b16 %v468, %v465
        %v472 = vpack.c.b16 %v469, %v466
        %v473 = vpack.c.b16 %v470, %v467
        %v474 = vrot.slane %v471, 6
        %v475 = vrot.slane %v472, 6
        %v476 = vrot.slane %v473, 6
        %477 = vrot.lane.b32.xlu0 %v474, 112
        %v478 = vpop.permute.xlu0 %477
        %479 = vrot.lane.b32.xlu0 %v475, 112
        %v480 = vpop.permute.xlu0 %479
        %481 = vrot.lane.b32.xlu0 %v476, 112
        %v482 = vpop.permute.xlu0 %481
        %vm483 = vcmask 916480
        %v484 = vsel %vm483, %v478, %v480
        %v485 = vsel %vm483, %v480, %v482
        %486 = vrot.lane.b32.xlu0 %v413, 111
        %v487 = vpop.permute.xlu0 %486
        %488 = vrot.lane.b32.xlu0 %v414, 111
        %v489 = vpop.permute.xlu0 %488
        %490 = vrot.lane.b32.xlu0 %v415, 111
        %v491 = vpop.permute.xlu0 %490
        %vm492 = vcmask 908288
        %v493 = vsel %vm492, %v487, %v489
        %v494 = vsel %vm492, %v489, %v491
        %v499 = vunpack.c.l.b16 %v345
        %v500 = vunpack.c.h.b16 %v345
        %v501 = vunpack.c.l.b16 %v346
        %v502 = vunpack.c.l.b16 %v347
        %v503 = vunpack.c.h.b16 %v347
        %v504 = vunpack.c.l.b16 %v348
        %v505 = vpack.c.b16 %v502, %v499
        %v506 = vpack.c.b16 %v503, %v500
        %v507 = vpack.c.b16 %v504, %v501
        %v508 = vrot.slane %v505, 2
        %v509 = vrot.slane %v506, 2
        %v510 = vrot.slane %v507, 2
        %511 = vrot.lane.b32.xlu0 %v508, 110
        %v512 = vpop.permute.xlu0 %511
        %513 = vrot.lane.b32.xlu0 %v509, 110
        %v514 = vpop.permute.xlu0 %513
        %515 = vrot.lane.b32.xlu0 %v510, 110
        %v516 = vpop.permute.xlu0 %515
        %vm517 = vcmask 900096
        %v518 = vsel %vm517, %v512, %v514
        %v519 = vsel %vm517, %v514, %v516
        %v524 = vunpack.c.l.b16 %v368
        %v525 = vunpack.c.h.b16 %v368
        %v526 = vunpack.c.l.b16 %v369
        %v527 = vunpack.c.l.b16 %v370
        %v528 = vunpack.c.h.b16 %v370
        %v529 = vunpack.c.l.b16 %v371
        %v530 = vpack.c.b16 %v524, %v524
        %v531 = vpack.c.b16 %v525, %v525
        %v532 = vpack.c.b16 %v526, %v526
        %v533 = vpack.c.b16 %v527, %v527
        %v534 = vpack.c.b16 %v528, %v528
        %v535 = vpack.c.b16 %v529, %v529
        %536 = vrot.lane.b32.xlu0 %v530, 96
        %v537 = vpop.permute.xlu0 %536
        %538 = vrot.lane.b32.xlu0 %v531, 96
        %v539 = vpop.permute.xlu0 %538
        %540 = vrot.lane.b32.xlu0 %v532, 96
        %v541 = vpop.permute.xlu0 %540
        %542 = vrot.lane.b32.xlu0 %v533, 96
        %v543 = vpop.permute.xlu0 %542
        %544 = vrot.lane.b32.xlu0 %v534, 96
        %v545 = vpop.permute.xlu0 %544
        %546 = vrot.lane.b32.xlu0 %v535, 96
        %v547 = vpop.permute.xlu0 %546
        %vm548 = vcmask 785408
        %v549 = vsel %vm548, %v537, %v539
        %v550 = vsel %vm548, %v539, %v541
        %v551 = vsel %vm548, %v543, %v545
        %v552 = vsel %vm548, %v545, %v547
        %v553 = vrot.slane %v413, 6
        %v554 = vrot.slane %v414, 6
        %v555 = vrot.slane %v415, 6
        %556 = vrot.lane.b32.xlu0 %v553, 95
        %v557 = vpop.permute.xlu0 %556
        %558 = vrot.lane.b32.xlu0 %v554, 95
        %v559 = vpop.permute.xlu0 %558
        %560 = vrot.lane.b32.xlu0 %v555, 95
        %v561 = vpop.permute.xlu0 %560
        %vm562 = vcmask 777216
        %v563 = vsel %vm562, %v557, %v559
        %v564 = vsel %vm562, %v559, %v561
        %v569 = vunpack.c.l.b16 %v391
        %v570 = vunpack.c.h.b16 %v391
        %v571 = vunpack.c.l.b16 %v392
        %v572 = vunpack.c.l.b16 %v393
        %v573 = vunpack.c.h.b16 %v393
        %v574 = vunpack.c.l.b16 %v394
        %v575 = vpack.c.b16 %v572, %v569
        %v576 = vpack.c.b16 %v573, %v570
        %v577 = vpack.c.b16 %v574, %v571
        %578 = vrot.lane.b32.xlu0 %v575, 94
        %v579 = vpop.permute.xlu0 %578
        %580 = vrot.lane.b32.xlu0 %v576, 94
        %v581 = vpop.permute.xlu0 %580
        %582 = vrot.lane.b32.xlu0 %v577, 94
        %v583 = vpop.permute.xlu0 %582
        %vm584 = vcmask 769024
        %v585 = vsel %vm584, %v579, %v581
        %v586 = vsel %vm584, %v581, %v583
        %vm587 = vcmask 1045504
        %v590 = vsel %vm587, %v401, %v426
        %v594 = vsel %vm587, %v402, %v427
        %vm596 = vcmask 1043456
        %v598 = vsel %vm596, %v426, %v457
        %v601 = vsel %vm596, %v427, %v458
        %vm603 = vcmask 1041408
        %v606 = vsel %vm603, %v459, %v484
        %v610 = vsel %vm603, %v460, %v485
        %v614 = vsel %vm587, %v493, %v518
        %v618 = vsel %vm587, %v494, %v519
        %v621 = vsel %vm596, %v518, %v549
        %v624 = vsel %vm596, %v519, %v550
        %v628 = vsel %vm603, %v551, %v563
        %v632 = vsel %vm603, %v552, %v564
        %v636 = vsel %vm587, %v585, 1065369472
        %v639 = vsel %vm587, %v586, 1065369472
        %vm641 = vcmask 1046528
        %vm642 = vsmask.f32 6400
        %vm643 = vmand %vm641, %vm642
        %v644 = vsel %vm643, %v636, 0
        %v645 = vsel %vm643, %v639, 0
        %v646 = vld [vmem:[%s2] sm:$0xf]
        %v647 = vld [vmem:[%s2 + $0x4] sm:$0xf]
        %v648 = vld [vmem:[%s2 + $0x8] sm:$0xf]
        %v649 = vld [vmem:[%s2 + $0xc] sm:$0xf]
        %v654 = vunpack.c.l.b16 %v646
        %v655 = vunpack.c.l.b16 %v647
        %v656 = vunpack.c.l.b16 %v648
        %v657 = vunpack.c.l.b16 %v649
        %v658 = vpack.c.b16 %v655, %v654
        %v659 = vpack.c.b16 %v657, %v656
        %662 = vmatpush.bf16.msra.mxu0 0
        %663 = vmatpush.bf16.msra.mxu0 %v644
        %664 = vmatpush.bf16.msra.mxu0 %v628
        %665 = vmatpush.bf16.msra.mxu0 %v621
        %666 = vmatpush.bf16.msra.mxu0 %v614
        %667 = vmatpush.bf16.msra.mxu0 %v606
        %668 = vmatpush.bf16.msra.mxu0 %v598
        %669 = vmatpush.bf16.msra.mxu0 %v590
        %670 = vmatmul.bf16.gmra.mxu0 %v658
        %v671 = vpop.f32.mrf.mxu0
        %v672 = vadd.f32 0.0, %v671
        %v673 = vpop.f32.mrf.mxu0
        %v674 = vadd.f32 0.0, %v673
        %675 = vmatmul.bf16.gmra.mxu0 %v659
        %v676 = vpop.f32.mrf.mxu0
        %v677 = vadd.f32 0.0, %v676
        %v678 = vpop.f32.mrf.mxu0
        %v679 = vadd.f32 0.0, %v678
        %680 = vdwg.mxu0
        %681 = vmatpush.bf16.msra.mxu0 0
        %682 = vmatpush.bf16.msra.mxu0 %v645
        %683 = vmatpush.bf16.msra.mxu0 %v632
        %684 = vmatpush.bf16.msra.mxu0 %v624
        %685 = vmatpush.bf16.msra.mxu0 %v618
        %686 = vmatpush.bf16.msra.mxu0 %v610
        %687 = vmatpush.bf16.msra.mxu0 %v601
        %688 = vmatpush.bf16.msra.mxu0 %v594
        %689 = vmatmul.bf16.gmra.mxu0 %v658
        %v690 = vpop.f32.mrf.mxu0
        %v691 = vadd.f32 0.0, %v690
        %v692 = vpop.f32.mrf.mxu0
        %v693 = vadd.f32 0.0, %v692
        %694 = vmatmul.bf16.gmra.mxu0 %v659
        %v695 = vpop.f32.mrf.mxu0
        %v696 = vadd.f32 0.0, %v695
        %v697 = vpop.f32.mrf.mxu0
        %v698 = vadd.f32 0.0, %v697
        %699 = vdwg.mxu0
        %v700 = vxor.u32 %v672, 2147483648
        %v701 = vxor.u32 %v691, 2147483648
        %v702 = vxor.u32 %v674, 2147483648
        %v703 = vxor.u32 %v693, 2147483648
        %v704 = vxor.u32 %v677, 2147483648
        %v705 = vxor.u32 %v696, 2147483648
        %v706 = vmul.f32 %v700, 1.442695
        %v707 = vpow.pop %v706
        %v708 = vmul.f32 %v701, 1.442695
        %v709 = vpow.pop %v708
        %v710 = vmul.f32 %v702, 1.442695
        %v711 = vpow.pop %v710
        %v712 = vmul.f32 %v703, 1.442695
        %v713 = vpow.pop %v712
        %v714 = vmul.f32 %v704, 1.442695
        %v715 = vpow.pop %v714
        %v716 = vmul.f32 %v705, 1.442695
        %v717 = vpow.pop %v716
        %v718 = vadd.f32 %v707, 1.0
        %v719 = vadd.f32 %v709, 1.0
        %v720 = vadd.f32 %v711, 1.0
        %v721 = vadd.f32 %v713, 1.0
        %v722 = vadd.f32 %v715, 1.0
        %v723 = vadd.f32 %v717, 1.0
        %v724 = vrcp.pop %v718
        %v725 = vmul.f32 %v718, %v724
        %v726 = vsub.f32 1.0, %v725
        %v727 = vmul.f32 %v724, %v726
        %v728 = vadd.f32 %v724, %v727
        %vm729 = vweird.f32 %v718
        %vm730 = vweird.f32 %v724
        %vm731 = vmor %vm729, %vm730
        %v732 = vsel %vm731, %v724, %v728
        %v733 = vand.u32 2147483647, %v718
        %vm734 = vcmp.eq.f32.partialorder %v733, 8.507059e+37
        %v735 = vand.u32 %v718, 2147483648
        %v736 = vor.u32 1.1754944e-38, %v735
        %v737 = vsel %vm734, %v736, %v732
        %v738 = vmul.f32 1.0, %v737
        %v739 = vrcp.pop %v719
        %v740 = vmul.f32 %v719, %v739
        %v741 = vsub.f32 1.0, %v740
        %v742 = vmul.f32 %v739, %v741
        %v743 = vadd.f32 %v739, %v742
        %vm744 = vweird.f32 %v719
        %vm745 = vweird.f32 %v739
        %vm746 = vmor %vm744, %vm745
        %v747 = vsel %vm746, %v739, %v743
        %v748 = vand.u32 2147483647, %v719
        %vm749 = vcmp.eq.f32.partialorder %v748, 8.507059e+37
        %v750 = vand.u32 %v719, 2147483648
        %v751 = vor.u32 1.1754944e-38, %v750
        %v752 = vsel %vm749, %v751, %v747
        %v753 = vmul.f32 1.0, %v752
        %v754 = vrcp.pop %v720
        %v755 = vmul.f32 %v720, %v754
        %v756 = vsub.f32 1.0, %v755
        %v757 = vmul.f32 %v754, %v756
        %v758 = vadd.f32 %v754, %v757
        %vm759 = vweird.f32 %v720
        %vm760 = vweird.f32 %v754
        %vm761 = vmor %vm759, %vm760
        %v762 = vsel %vm761, %v754, %v758
        %v763 = vand.u32 2147483647, %v720
        %vm764 = vcmp.eq.f32.partialorder %v763, 8.507059e+37
        %v765 = vand.u32 %v720, 2147483648
        %v766 = vor.u32 1.1754944e-38, %v765
        %v767 = vsel %vm764, %v766, %v762
        %v768 = vmul.f32 1.0, %v767
        %v769 = vrcp.pop %v721
        %v770 = vmul.f32 %v721, %v769
        %v771 = vsub.f32 1.0, %v770
        %v772 = vmul.f32 %v769, %v771
        %v773 = vadd.f32 %v769, %v772
        %vm774 = vweird.f32 %v721
        %vm775 = vweird.f32 %v769
        %vm776 = vmor %vm774, %vm775
        %v777 = vsel %vm776, %v769, %v773
        %v778 = vand.u32 2147483647, %v721
        %vm779 = vcmp.eq.f32.partialorder %v778, 8.507059e+37
        %v780 = vand.u32 %v721, 2147483648
        %v781 = vor.u32 1.1754944e-38, %v780
        %v782 = vsel %vm779, %v781, %v777
        %v783 = vmul.f32 1.0, %v782
        %v784 = vrcp.pop %v722
        %v785 = vmul.f32 %v722, %v784
        %v786 = vsub.f32 1.0, %v785
        %v787 = vmul.f32 %v784, %v786
        %v788 = vadd.f32 %v784, %v787
        %vm789 = vweird.f32 %v722
        %vm790 = vweird.f32 %v784
        %vm791 = vmor %vm789, %vm790
        %v792 = vsel %vm791, %v784, %v788
        %v793 = vand.u32 2147483647, %v722
        %vm794 = vcmp.eq.f32.partialorder %v793, 8.507059e+37
        %v795 = vand.u32 %v722, 2147483648
        %v796 = vor.u32 1.1754944e-38, %v795
        %v797 = vsel %vm794, %v796, %v792
        %v798 = vmul.f32 1.0, %v797
        %v799 = vrcp.pop %v723
        %v800 = vmul.f32 %v723, %v799
        %v801 = vsub.f32 1.0, %v800
        %v802 = vmul.f32 %v799, %v801
        %v803 = vadd.f32 %v799, %v802
        %vm804 = vweird.f32 %v723
        %vm805 = vweird.f32 %v799
        %vm806 = vmor %vm804, %vm805
        %v807 = vsel %vm806, %v799, %v803
        %v808 = vand.u32 2147483647, %v723
        %vm809 = vcmp.eq.f32.partialorder %v808, 8.507059e+37
        %v810 = vand.u32 %v723, 2147483648
        %v811 = vor.u32 1.1754944e-38, %v810
        %v812 = vsel %vm809, %v811, %v807
        %v813 = vmul.f32 1.0, %v812
        %v814 = vtanh.pop %v679
        %v815 = vtanh.pop %v698
        %v816 = vld [vmem:[%s226] sm:$0xff]
        %v817 = vld [vmem:[%s226 + $0x8] sm:$0xff]
        %v818 = vmul.f32 %v768, %v816
        %v819 = vmul.f32 %v783, %v817
        %v820 = vmul.f32 %v738, %v814
        %v821 = vmul.f32 %v753, %v815
        %v822 = vadd.f32 %v818, %v820
        %v823 = vadd.f32 %v819, %v821
        %v824 = vtanh.pop %v822
        %v825 = vtanh.pop %v823
        %v826 = vmul.f32 %v798, %v824
        %v827 = vmul.f32 %v813, %v825
        %v828 = vpack.c.bf16 %v827, %v826
        %829 = vst [vmem:[%s209] sm:$0xff] %v828
        %830 = vst [vmem:[%s216] sm:$0xff] %v822
        %831 = vst [vmem:[%s216 + $0x8] sm:$0xff] %v823
        %s832 = sand.u32 %s103, 1
        %s833 = scalar_lea.sflag [#allocation3], %s832
        %s834 = sand.u32 %s103, 1
        %s835 = smul.addr %s834, 8
        %s836 = scalar_lea.vmem [#allocation2], %s835
        %s837 = sand.u32 %s129, 1
        %s838 = scalar_lea.sflag [#allocation5], %s837
        %s839 = sand.u32 %s129, 1
        %s840 = smul.addr %s839, 16
        %s841 = scalar_lea.vmem [#allocation4], %s840
        // Predicated region
        $region33: #{tpu_custom_call.1} parent=31 // pred_check
          %p842 = pneg %p113
        $region34: #{tpu_custom_call.1} parent=31 // pred_check_branch
          %844 = sbr.rel (%p842) target = $region36
        $region35: #{tpu_custom_call.1} parent=31 // pred_region
          %846 = vsyncadd %s833, 0
          %s847 = smul.addr %s22, 2
          %s848 = smul.addr %s847, 4
          %s849 = scalar_lea.hbm %s3, %s848
          %s851 = sshll.u32 %s836, 4
          %s852 = int_to_ptr.vmem [resolvable:$true] %s851
          %s853 = sshll.u32 %s849, 4
          %s854 = int_to_ptr.hbm [resolvable:$true] %s853
          %856 = dma.vmem_to_hbm [thread:$0]  %s852, 128, %s854, %s833
        $region36: #{tpu_custom_call.1} parent=31 // pred_fallthru
          _
        // Predicated region
        $region37: #{tpu_custom_call.1} parent=31 // pred_check
          %p857 = pneg %p139
        $region38: #{tpu_custom_call.1} parent=31 // pred_check_branch
          %859 = sbr.rel (%p857) target = $region40
        $region39: #{tpu_custom_call.1} parent=31 // pred_region
          %861 = vsyncadd %s838, 0
          %s862 = smul.addr %s22, 2
          %s863 = smul.addr %s862, 8
          %s864 = scalar_lea.hbm %s4, %s863
          %s866 = sshll.u32 %s841, 4
          %s867 = int_to_ptr.vmem [resolvable:$true] %s866
          %s868 = sshll.u32 %s864, 4
          %s869 = int_to_ptr.hbm [resolvable:$true] %s868
          %871 = dma.vmem_to_hbm [thread:$0]  %s867, 256, %s869, %s838
        $region40: #{tpu_custom_call.1} parent=31 // pred_fallthru
          _
      $region32: #{tpu_custom_call.1} parent=5 // pred_fallthru
        _
      %p872 = scmp.le.s32.totalorder 2, %s17
      // Predicated region
      $region41: #{tpu_custom_call.1} parent=5 // pred_check
        %p873 = pneg %p872
      $region42: #{tpu_custom_call.1} parent=5 // pred_check_branch
        %875 = sbr.rel (%p873) target = $region44
      $region43: #{tpu_custom_call.1} parent=5 // pred_region
        %s876 = ssub.s32 %s17, 2
        // Predicated region
        $region45: #{tpu_custom_call.1} parent=43 // pred_check
          %p877 = pneg %p119
        $region46: #{tpu_custom_call.1} parent=43 // pred_check_branch
          %879 = sbr.rel (%p877) target = $region48
        $region47: #{tpu_custom_call.1} parent=43 // pred_region
          %s880 = sand.u32 %s104, 1
          %s881 = scalar_lea.sflag [#allocation3], %s880
          %s882 = sand.u32 %s104, 1
          %s883 = smul.addr %s882, 8
          %s884 = scalar_lea.vmem [#allocation2], %s883
          %886 = dma.done %s881, 128
        $region48: #{tpu_custom_call.1} parent=43 // pred_fallthru
          _
        // Predicated region
        $region49: #{tpu_custom_call.1} parent=43 // pred_check
          %p887 = pneg %p145
        $region50: #{tpu_custom_call.1} parent=43 // pred_check_branch
          %889 = sbr.rel (%p887) target = $region52
        $region51: #{tpu_custom_call.1} parent=43 // pred_region
          %s890 = sand.u32 %s130, 1
          %s891 = scalar_lea.sflag [#allocation5], %s890
          %s892 = sand.u32 %s130, 1
          %s893 = smul.addr %s892, 16
          %s894 = scalar_lea.vmem [#allocation4], %s893
          %896 = dma.done %s891, 256
        $region52: #{tpu_custom_call.1} parent=43 // pred_fallthru
          _
      $region44: #{tpu_custom_call.1} parent=5 // pred_fallthru
        _
    $region6: #{tpu_custom_call.1} parent=1 // loop_footer
      %s21 = sadd.s32 1, %s17
    $region7: #{tpu_custom_call.1} parent=1 // loop_footer_branch
      %16 = sbr.rel target = $region3
    $region8: #{tpu_custom_call.1} parent=1 // loop_exit
      _
    %897 = vsyncpa [#allocation3], 1
    %s898 = scalar_lea.sflag [#allocation3], 1
    %899 = vsyncpa %s898, 1
    %900 = vsyncpa [#allocation5], 1
    %s901 = scalar_lea.sflag [#allocation5], 1
    %902 = vsyncpa %s901, 1

</llo_original>
